<compile_context>
chip_gen: v5e
topology: v5e:2x2
jax: 0.10.0
libtpu: 0.0.40
codegen_flags: <defaults>
</compile_context>

<pallas_src>
import functools

import jax
import jax.numpy as jnp
from jax import lax
from jax.experimental import pallas as pl
from jax.experimental.pallas import tpu as pltpu

LANE = 128
TARGET_BLOCK_BYTES = 1 << 20          # ~1 MiB per input block (perf review)


def _num_parallel_tensorcores():
    """Best-effort count of TensorCores a leading 'parallel' axis can use."""
    try:
        kind = jax.devices()[0].device_kind.lower()
    except Exception:
        return 1
    # Multi-TensorCore-per-device chips: v4, v5p, v7x.  v5e/v6e expose one TC.
    if any(tag in kind for tag in ("v4", "v5p", "v7", "tpu7", "7x")):
        return 2
    return 1


def _prior_mse_kernel(y_ref, yt_ref, p_ref, out_ref, acc_ref, *,
                      rows, tile_rows, blocks_per_core, acc_rows, needs_mask):
    j = pl.program_id(1)

    @pl.when(j == 0)
    def _():
        acc_ref[...] = jnp.zeros_like(acc_ref)

    y = y_ref[...].astype(jnp.float32)
    yt = yt_ref[...].astype(jnp.float32)
    p = p_ref[...].astype(jnp.float32)
    d = y - yt
    prod = d * d * p

    def _fold(x):
        # Free vreg-group reshape + cross-vreg VPU adds; no per-step XLU fold.
        if acc_rows == 8:
            return x.reshape(tile_rows // 8, 8, LANE).sum(axis=0)
        return jnp.sum(x, axis=0, keepdims=True)

    if not needs_mask:
        # Common case: rows % tile_rows == 0 and no clamped duplicate steps.
        acc_ref[...] += _fold(prod)
    else:
        # Unclamped global block index: fully-clamped duplicate steps get an
        # all-false mask (contribute 0); the genuine partial tail block keeps
        # its window origin (Pallas pads OOB reads, it does not shift the
        # block), so `row0 + r` is the true global row.
        blk = pl.program_id(0) * blocks_per_core + j
        row0 = blk * tile_rows
        is_full = row0 + tile_rows <= rows

        @pl.when(is_full)
        def _():
            acc_ref[...] += _fold(prod)

        @pl.when(jnp.logical_not(is_full))
        def _():
            local = lax.broadcasted_iota(jnp.int32, (tile_rows, LANE), 0)
            valid = local < (rows - row0)
            acc_ref[...] += _fold(jnp.where(valid, prod, 0.0))

    @pl.when(j == pl.num_programs(1) - 1)
    def _():
        out_ref[0] = acc_ref[...]


def prior_mse_loss(y, y_true, prior):
    """Pallas implementation of PriorMSELoss.forward: mean((y - y_true)**2 * prior)."""
    assert y.shape == y_true.shape == prior.shape
    total = y.size

    flats = [a.reshape(-1) for a in (y, y_true, prior)]
    rows = total // LANE
    lane_tail = total % LANE

    tail_sum = jnp.float32(0.0)
    if lane_tail:
        # TODO(synk): the prefix slice below may still materialize a copy; a
        # fully copy-free path would need 1-D blocks + flat-index masking (or
        # manual DMA) inside the kernel.
        t_y, t_yt, t_p = (a[rows * LANE:].astype(jnp.float32) for a in flats)
        td = t_y - t_yt
        tail_sum = jnp.sum(td * td * t_p)
        flats = [a[: rows * LANE] for a in flats]

    if rows == 0:                       # tiny (< 128 elements) input
        return tail_sum / jnp.float32(total)

    slabs = [a.reshape(rows, LANE) for a in flats]

    # Size the tile in bytes (native-dtype DMA): ~1 MiB per input block.
    itemsize = max(a.dtype.itemsize for a in slabs)
    tile_cap = max(8, (TARGET_BLOCK_BYTES // (LANE * itemsize)) // 8 * 8)
    tile_rows = min(tile_cap, rows)     # full dim when the input is small
    nrb = pl.cdiv(rows, tile_rows)      # number of row blocks
    ncores = max(1, min(_num_parallel_tensorcores(), nrb))
    bpc = pl.cdiv(nrb, ncores)          # row blocks per parallel slice
    grid = (ncores, bpc)

    acc_rows = 8 if tile_rows % 8 == 0 else 1
    needs_mask = (rows % tile_rows != 0) or (ncores * bpc != nrb)

    def in_map(i, j):
        # Clamp so the DMA never targets a fully out-of-range block; the
        # in-kernel mask (unclamped index) zeroes any re-read data.
        return (jnp.minimum(i * bpc + j, nrb - 1), 0)

    tile_spec = pl.BlockSpec((tile_rows, LANE), in_map)
    out_spec = pl.BlockSpec((1, acc_rows, LANE), lambda i, j: (i, 0, 0))

    kernel = functools.partial(
        _prior_mse_kernel,
        rows=rows, tile_rows=tile_rows, blocks_per_core=bpc,
        acc_rows=acc_rows, needs_mask=needs_mask)

    cost = pl.CostEstimate(
        flops=3 * rows * LANE,
        transcendentals=0,
        bytes_accessed=sum(a.size * a.dtype.itemsize for a in slabs)
        + ncores * acc_rows * LANE * 4,
    )

    partials = pl.pallas_call(
        kernel,
        out_shape=jax.ShapeDtypeStruct((ncores, acc_rows, LANE), jnp.float32),
        grid_spec=pltpu.PrefetchScalarGridSpec(
            num_scalar_prefetch=0,
            grid=grid,
            in_specs=[tile_spec, tile_spec, tile_spec],
            out_specs=out_spec,
            scratch_shapes=[pltpu.VMEM((acc_rows, LANE), jnp.float32)],
        ),
        compiler_params=pltpu.CompilerParams(
            # TODO(synk): on v7x verify "parallel" actually shards the leading
            # axis across both TensorCores; if not, switch to pltpu.CORE_PARALLEL.
            dimension_semantics=("parallel", "arbitrary"),
            vmem_limit_bytes=32 * 1024 * 1024,
        ),
        cost_estimate=cost,
    )(*slabs)

    # Single final cross-lane/sublane reduce + mean over the element count.
    return (jnp.sum(partials) + tail_sum) / jnp.float32(total)


if __name__ == "__main__":
    key = jax.random.PRNGKey(0)
    k1, k2, k3 = jax.random.split(key, 3)

    # Small NCHW-shaped inputs consistent with autoencoder output / target / prior.
    shape = (2, 4, 16, 16)
    y = jax.random.normal(k1, shape, dtype=jnp.float32)
    y_true = jax.random.normal(k2, shape, dtype=jnp.float32)
    prior = jax.random.uniform(k3, shape, dtype=jnp.float32)

    loss = jax.block_until_ready(prior_mse_loss(y, y_true, prior))

    # Reference check (plain JAX).
    ref = jnp.mean((y - y_true) ** 2 * prior)
    assert jnp.allclose(loss, ref, rtol=1e-5, atol=1e-6), (loss, ref)

    print("KERNEL_OK")
</pallas_src>

<mosaic_0001>
module attributes {stable_mosaic.version = 11 : i64} {
  func.func @_prior_mse_kernel(%arg0: i32, %arg1: i32, %arg2: memref<16x128xf32, #tpu.memory_space<vmem>>, %arg3: memref<16x128xf32, #tpu.memory_space<vmem>>, %arg4: memref<16x128xf32, #tpu.memory_space<vmem>>, %arg5: memref<1x8x128xf32, #tpu.memory_space<vmem>>, %arg6: memref<8x128xf32, #tpu.memory_space<vmem>>) attributes {dimension_semantics = [#tpu.dimension_semantics<parallel>, #tpu.dimension_semantics<arbitrary>], iteration_bounds = array<i64: 1, 1>, scalar_prefetch = 0 : i64, scratch_operands = 1 : i64, tpu.core_type = #tpu.core_type<tc>, window_params = [{transform_indices = @transform_0, window_bounds = array<i64: 16, 128>}, {transform_indices = @transform_1, window_bounds = array<i64: 16, 128>}, {transform_indices = @transform_2, window_bounds = array<i64: 16, 128>}, {transform_indices = @transform_3, window_bounds = array<i64: 1, 8, 128>}]} {
    %c0_i32 = arith.constant 0 : i32
    %0 = arith.cmpi eq, %arg1, %c0_i32 : i32
    %1 = arith.extui %0 : i1 to i32
    %c0_i32_0 = arith.constant 0 : i32
    %2 = arith.cmpi ne, %1, %c0_i32_0 : i32
    scf.if %2 {
      %cst_12 = arith.constant 0.000000e+00 : f32
      %17 = vector.broadcast %cst_12 : f32 to vector<8x128xf32>
      %c0_13 = arith.constant 0 : index
      %c0_14 = arith.constant 0 : index
      %18 = vector.load %arg6[%c0_13, %c0_14] : memref<8x128xf32, #tpu.memory_space<vmem>>, vector<8x128xf32>
      tpu.vector_store %arg6[%c0_13, %c0_14], %17 {strides = array<i32>} : memref<8x128xf32, #tpu.memory_space<vmem>>, vector<8x128xf32>,
    } else {
    }
    %c0 = arith.constant 0 : index
    %c0_1 = arith.constant 0 : index
    %3 = vector.load %arg2[%c0, %c0_1] : memref<16x128xf32, #tpu.memory_space<vmem>>, vector<16x128xf32>
    %c0_2 = arith.constant 0 : index
    %c0_3 = arith.constant 0 : index
    %4 = vector.load %arg3[%c0_2, %c0_3] : memref<16x128xf32, #tpu.memory_space<vmem>>, vector<16x128xf32>
    %c0_4 = arith.constant 0 : index
    %c0_5 = arith.constant 0 : index
    %5 = vector.load %arg4[%c0_4, %c0_5] : memref<16x128xf32, #tpu.memory_space<vmem>>, vector<16x128xf32>
    %6 = arith.subf %3, %4 : vector<16x128xf32>
    %7 = arith.mulf %6, %6 : vector<16x128xf32>
    %8 = arith.mulf %7, %5 : vector<16x128xf32>
    %c0_6 = arith.constant 0 : index
    %c0_7 = arith.constant 0 : index
    %9 = vector.load %arg6[%c0_6, %c0_7] : memref<8x128xf32, #tpu.memory_space<vmem>>, vector<8x128xf32>
    %10 = vector.shape_cast %8 : vector<16x128xf32> to vector<2x8x128xf32>
    %cst = arith.constant dense<0.000000e+00> : vector<8x128xf32>
    %11 = vector.multi_reduction <add>, %10, %cst [0] : vector<2x8x128xf32> to vector<8x128xf32>
    %12 = arith.addf %9, %11 : vector<8x128xf32>
    %c0_8 = arith.constant 0 : index
    %c0_9 = arith.constant 0 : index
    %13 = vector.load %arg6[%c0_8, %c0_9] : memref<8x128xf32, #tpu.memory_space<vmem>>, vector<8x128xf32>
    tpu.vector_store %arg6[%c0_8, %c0_9], %12 {strides = array<i32>} : memref<8x128xf32, #tpu.memory_space<vmem>>, vector<8x128xf32>,
    %c0_i32_10 = arith.constant 0 : i32
    %14 = arith.cmpi eq, %arg1, %c0_i32_10 : i32
    %15 = arith.extui %14 : i1 to i32
    %c0_i32_11 = arith.constant 0 : i32
    %16 = arith.cmpi ne, %15, %c0_i32_11 : i32
    scf.if %16 {
      %c0_12 = arith.constant 0 : index
      %c0_13 = arith.constant 0 : index
      %17 = vector.load %arg6[%c0_12, %c0_13] : memref<8x128xf32, #tpu.memory_space<vmem>>, vector<8x128xf32>
      %c0_14 = arith.constant 0 : index
      %c0_15 = arith.constant 0 : index
      %c0_16 = arith.constant 0 : index
      %18 = vector.load %arg5[%c0_14, %c0_15, %c0_16] : memref<1x8x128xf32, #tpu.memory_space<vmem>>, vector<1x8x128xf32>
      %19 = vector.shape_cast %18 : vector<1x8x128xf32> to vector<8x128xf32>
      %20 = vector.shape_cast %17 : vector<8x128xf32> to vector<1x8x128xf32>
      tpu.vector_store %arg5[%c0_14, %c0_15, %c0_16], %20 {strides = array<i32>} : memref<1x8x128xf32, #tpu.memory_space<vmem>>, vector<1x8x128xf32>,
    } else {
    }
    return
  }
  func.func @transform_0(%arg0: i32, %arg1: i32) -> (i32, i32) {
    %c1_i32 = arith.constant 1 : i32
    %0 = arith.muli %arg0, %c1_i32 : i32
    %1 = arith.addi %0, %arg1 : i32
    %c0_i32 = arith.constant 0 : i32
    %2 = arith.minsi %1, %c0_i32 : i32
    %c0_i32_0 = arith.constant 0 : i32
    %c0_i32_1 = arith.constant 0 : i32
    return %2, %c0_i32_0 : i32, i32
  }
  func.func @transform_1(%arg0: i32, %arg1: i32) -> (i32, i32) {
    %c1_i32 = arith.constant 1 : i32
    %0 = arith.muli %arg0, %c1_i32 : i32
    %1 = arith.addi %0, %arg1 : i32
    %c0_i32 = arith.constant 0 : i32
    %2 = arith.minsi %1, %c0_i32 : i32
    %c0_i32_0 = arith.constant 0 : i32
    %c0_i32_1 = arith.constant 0 : i32
    return %2, %c0_i32_0 : i32, i32
  }
  func.func @transform_2(%arg0: i32, %arg1: i32) -> (i32, i32) {
    %c1_i32 = arith.constant 1 : i32
    %0 = arith.muli %arg0, %c1_i32 : i32
    %1 = arith.addi %0, %arg1 : i32
    %c0_i32 = arith.constant 0 : i32
    %2 = arith.minsi %1, %c0_i32 : i32
    %c0_i32_0 = arith.constant 0 : i32
    %c0_i32_1 = arith.constant 0 : i32
    return %2, %c0_i32_0 : i32, i32
  }
  func.func @transform_3(%arg0: i32, %arg1: i32) -> (i32, i32, i32) {
    %c0_i32 = arith.constant 0 : i32
    %c0_i32_0 = arith.constant 0 : i32
    %c0_i32_1 = arith.constant 0 : i32
    return %arg0, %c0_i32, %c0_i32_0 : i32, i32, i32
  }
}

</mosaic_0001>

<llo_original>
// kernel: tpu_custom_call.1
$region0: #{tpu_custom_call.1}
  #allocation0 [shape = 'u32[]', space=smem, size = 0x4, offset = 0x4, fixed_abs, tag = 'smem constant byte address 0x4 - core index']
  #allocation1 [shape = 'u32[72,128]{1,0:T(1,128)}', space=vmem, size = 0x9000, scoped, tag = 'internal scratch']
  #allocation2 [shape = 'f32[8,128]{1,0:T(8,128)}', space=vmem, size = 0x1000, scoped, tag = 'scratch operand']
  %s0 = inlined_call_operand.hbm [shape: f32[16,128], index: 0, kind: input, shape index: {}]
  %s1 = inlined_call_operand.hbm [shape: f32[16,128], index: 1, kind: input, shape index: {}]
  %s2 = inlined_call_operand.hbm [shape: f32[16,128], index: 2, kind: input, shape index: {}]
  %s3 = inlined_call_operand.hbm [shape: f32[1,8,128], index: 3, kind: output, shape index: {}]
  %s4 = sld [smem:[#allocation0]]
  $region42: #{tpu_custom_call.1} parent=0
    _
  %s6 = ssub.s32 1, %s4
  %s7 = scalar_select 0, %s6, %s4
  $region1: #{tpu_custom_call.1} parent=0
    #allocation3 [shape = 'u8[8192]{0}', space=vmem, size = 0x2000, scoped, tag = 'input window, operand 0, single buffered']
    #allocation4 [shape = 's32[1]{0}', space=sflag, size = 0x4, scoped, tag = 'scoped memory for tpu_custom_call.1']
    #allocation5 [shape = 's32[1]{0}', space=sflag, size = 0x4, scoped, tag = 'scoped memory for tpu_custom_call.1']
    #allocation6 [shape = 'u8[8192]{0}', space=vmem, size = 0x2000, scoped, tag = 'input window, operand 1, single buffered']
    #allocation7 [shape = 's32[1]{0}', space=sflag, size = 0x4, scoped, tag = 'scoped memory for tpu_custom_call.1']
    #allocation8 [shape = 'u8[8192]{0}', space=vmem, size = 0x2000, scoped, tag = 'input window, operand 2, single buffered']
    #allocation9 [shape = 'u8[4096]{0}', space=vmem, size = 0x1000, scoped, tag = 'output window, operand 0, single buffered']
    %8 = vsyncpa [#allocation4], 0
    %9 = vsyncpa [#allocation7], 0
    %10 = vsyncpa [#allocation5], 0
    // Predicated region
    $region2: #{tpu_custom_call.1} parent=1 // pred_check
      _
    $region3: #{tpu_custom_call.1} parent=1 // pred_check_branch
      %12 = sbr.rel (0) target = $region5
    $region4: #{tpu_custom_call.1} parent=1 // pred_region
      %s13 = sadd.s32 0, 0
      %p14 = scmp.lt.s32.totalorder %s13, 0
      %s15 = scalar_select %p14, %s13, 0
      %s16 = smul.u32 2, %s15
      %18 = vsyncadd [#allocation4], 0
      %s19 = smul.addr %s16, 8
      %s20 = scalar_lea.hbm %s0, %s19
      %s21 = sshll.u32 %s20, 4
      %s22 = int_to_ptr.hbm [resolvable:$true] %s21
      %s23 = sshll.u32 [#allocation3], 4
      %s24 = int_to_ptr.vmem [resolvable:$true] %s23
      %29 = dma.hbm_to_vmem [thread:$0]  %s22, 256, %s24, [#allocation4], 128, 128, 8
    $region5: #{tpu_custom_call.1} parent=1 // pred_fallthru
      _
    // Predicated region
    $region6: #{tpu_custom_call.1} parent=1 // pred_check
      _
    $region7: #{tpu_custom_call.1} parent=1 // pred_check_branch
      %31 = sbr.rel (0) target = $region9
    $region8: #{tpu_custom_call.1} parent=1 // pred_region
      %s32 = sadd.s32 0, 0
      %p33 = scmp.lt.s32.totalorder %s32, 0
      %s34 = scalar_select %p33, %s32, 0
      %s35 = smul.u32 2, %s34
      %37 = vsyncadd [#allocation7], 0
      %s38 = smul.addr %s35, 8
      %s39 = scalar_lea.hbm %s1, %s38
      %s40 = sshll.u32 %s39, 4
      %s41 = int_to_ptr.hbm [resolvable:$true] %s40
      %s42 = sshll.u32 [#allocation6], 4
      %s43 = int_to_ptr.vmem [resolvable:$true] %s42
      %48 = dma.hbm_to_vmem [thread:$0]  %s41, 256, %s43, [#allocation7], 128, 128, 8
    $region9: #{tpu_custom_call.1} parent=1 // pred_fallthru
      _
    // Predicated region
    $region10: #{tpu_custom_call.1} parent=1 // pred_check
      _
    $region11: #{tpu_custom_call.1} parent=1 // pred_check_branch
      %50 = sbr.rel (0) target = $region13
    $region12: #{tpu_custom_call.1} parent=1 // pred_region
      %s51 = sadd.s32 0, 0
      %p52 = scmp.lt.s32.totalorder %s51, 0
      %s53 = scalar_select %p52, %s51, 0
      %s54 = smul.u32 2, %s53
      %56 = vsyncadd [#allocation7], 0
      %s57 = smul.addr %s54, 8
      %s58 = scalar_lea.hbm %s2, %s57
      %s59 = sshll.u32 %s58, 4
      %s60 = int_to_ptr.hbm [resolvable:$true] %s59
      %s61 = sshll.u32 [#allocation8], 4
      %s62 = int_to_ptr.vmem [resolvable:$true] %s61
      %67 = dma.hbm_to_vmem [thread:$0]  %s60, 256, %s62, [#allocation7], 128, 128, 8
    $region13: #{tpu_custom_call.1} parent=1 // pred_fallthru
      _
    // Predicated region
    $region14: #{tpu_custom_call.1} parent=1 // pred_check
      _
    $region15: #{tpu_custom_call.1} parent=1 // pred_check_branch
      %69 = sbr.rel (0) target = $region17
    $region16: #{tpu_custom_call.1} parent=1 // pred_region
      %71 = dma.done [#allocation4], 256
    $region17: #{tpu_custom_call.1} parent=1 // pred_fallthru
      _
    // Predicated region
    $region18: #{tpu_custom_call.1} parent=1 // pred_check
      _
    $region19: #{tpu_custom_call.1} parent=1 // pred_check_branch
      %73 = sbr.rel (0) target = $region21
    $region20: #{tpu_custom_call.1} parent=1 // pred_region
      %75 = dma.done [#allocation7], 256
    $region21: #{tpu_custom_call.1} parent=1 // pred_fallthru
      _
    // Predicated region
    $region22: #{tpu_custom_call.1} parent=1 // pred_check
      _
    $region23: #{tpu_custom_call.1} parent=1 // pred_check_branch
      %77 = sbr.rel (0) target = $region25
    $region24: #{tpu_custom_call.1} parent=1 // pred_region
      %79 = dma.done [#allocation7], 256
    $region25: #{tpu_custom_call.1} parent=1 // pred_fallthru
      _
    %s80 = sadd.s32 0, 0
    %p81 = scmp.lt.s32.totalorder %s80, 0
    %s82 = scalar_select %p81, %s80, 0
    %s83 = smul.u32 2, %s82
    %s84 = sadd.s32 0, 0
    %p85 = scmp.lt.s32.totalorder %s84, 0
    %s86 = scalar_select %p85, %s84, 0
    %s87 = smul.u32 2, %s86
    %s88 = sadd.s32 0, 0
    %p89 = scmp.lt.s32.totalorder %s88, 0
    %s90 = scalar_select %p89, %s88, 0
    %s91 = smul.u32 2, %s90
    %p92 = scmp.eq.s32.totalorder 0, 0
    // Predicated region
    $region26: #{tpu_custom_call.1} parent=1 // pred_check
      %p93 = pneg %p92
    $region27: #{tpu_custom_call.1} parent=1 // pred_check_branch
      %95 = sbr.rel (%p93) target = $region29
    $region28: #{tpu_custom_call.1} parent=1 // pred_region
      %96 = vst [vmem:[#allocation2] sm:$0xff] 0.0
    $region29: #{tpu_custom_call.1} parent=1 // pred_fallthru
      _
    %v97 = vld [vmem:[#allocation3] sm:$0xff]
    %v98 = vld [vmem:[#allocation3 + $0x8] sm:$0xff]
    %v99 = vld [vmem:[#allocation6] sm:$0xff]
    %v100 = vld [vmem:[#allocation6 + $0x8] sm:$0xff]
    %v101 = vld [vmem:[#allocation8] sm:$0xff]
    %v102 = vld [vmem:[#allocation8 + $0x8] sm:$0xff]
    %v103 = vsub.f32 %v97, %v99
    %v104 = vsub.f32 %v98, %v100
    %v105 = vmul.f32 %v103, %v103
    %v106 = vmul.f32 %v104, %v104
    %v107 = vmul.f32 %v105, %v101
    %v108 = vmul.f32 %v106, %v102
    %v109 = vld [vmem:[#allocation2] sm:$0xff]
    %v110 = vadd.f32 %v107, %v108
    %v111 = vadd.f32 %v109, %v110
    %112 = vst [vmem:[#allocation2] sm:$0xff] %v111
    // Predicated region
    $region30: #{tpu_custom_call.1} parent=1 // pred_check
      %p113 = pneg %p92
    $region31: #{tpu_custom_call.1} parent=1 // pred_check_branch
      %115 = sbr.rel (%p113) target = $region33
    $region32: #{tpu_custom_call.1} parent=1 // pred_region
      %v116 = vld [vmem:[#allocation2] sm:$0xff]
      %117 = vst [vmem:[#allocation9] sm:$0xff] %v116
    $region33: #{tpu_custom_call.1} parent=1 // pred_fallthru
      _
    // Predicated region
    $region34: #{tpu_custom_call.1} parent=1 // pred_check
      _
    $region35: #{tpu_custom_call.1} parent=1 // pred_check_branch
      %119 = sbr.rel (0) target = $region37
    $region36: #{tpu_custom_call.1} parent=1 // pred_region
      %121 = vsyncadd [#allocation5], 0
      %s123 = sshll.u32 [#allocation9], 4
      %s124 = int_to_ptr.vmem [resolvable:$true] %s123
      %s125 = sshll.u32 %s3, 4
      %s126 = int_to_ptr.hbm [resolvable:$true] %s125
      %128 = dma.vmem_to_hbm [thread:$0]  %s124, 128, %s126, [#allocation5]
    $region37: #{tpu_custom_call.1} parent=1 // pred_fallthru
      _
    // Predicated region
    $region38: #{tpu_custom_call.1} parent=1 // pred_check
      _
    $region39: #{tpu_custom_call.1} parent=1 // pred_check_branch
      %130 = sbr.rel (0) target = $region41
    $region40: #{tpu_custom_call.1} parent=1 // pred_region
      %132 = dma.done [#allocation5], 128
    $region41: #{tpu_custom_call.1} parent=1 // pred_fallthru
      _
    %133 = vsyncpa [#allocation4], 1
    %134 = vsyncpa [#allocation7], 1
    %135 = vsyncpa [#allocation5], 1

</llo_original>
